<compile_context>
chip_gen: v6e
topology: v6e:2x2x1
jax: 0.10.0
libtpu: 0.0.40
codegen_flags: <defaults>
</compile_context>

<pallas_src>
import jax
import jax.numpy as jnp
from jax import lax
from jax.experimental import pallas as pl
from jax.experimental.pallas import tpu as pltpu


def _ens3_kernel(x_ref, w_ref, b_ref, out_ref):
    # Single MXU contraction with the pre-averaged ensemble weight.
    y = jnp.dot(x_ref[...], w_ref[...],
                preferred_element_type=jnp.float32)     # (TB, C) f32 accum
    out_ref[...] = (y + b_ref[...]).astype(out_ref.dtype)


def ens_wrapper3(x, w1, b1, w2, b2, w3, b3, *,
                 tile_b=512, compute_dtype=jnp.bfloat16):
    """x:(B,H); w_k:(H,C); b_k:(C,).  Returns (B,C) = mean of the 3 heads."""
    B, H = x.shape
    C = w1.shape[1]

    # --- static ensemble fusion (weights are constants at wrapper build) ---
    # mean of three linear heads == one linear head with averaged parameters
    w_mean = ((w1 + w2 + w3) * (1.0 / 3.0)).astype(compute_dtype)   # (H, C)
    b_mean = ((b1 + b2 + b3) * (1.0 / 3.0)).astype(jnp.float32)
    b_mean = b_mean.reshape(1, C)

    x_c = x.astype(compute_dtype)

    # --- tiling: big batch tiles, but keep >= 2 grid steps when possible so
    #     both v7x TensorCores are used; pad B to a tile multiple if needed ---
    tb = min(tile_b, B)
    if pl.cdiv(B, tb) < 2 and B >= 16:
        tb = ((pl.cdiv(B, 2) + 7) // 8) * 8      # split batch over 2 steps
    num_tiles = pl.cdiv(B, tb)
    b_pad = num_tiles * tb
    if b_pad != B:
        x_c = jnp.pad(x_c, ((0, b_pad - B), (0, 0)))

    elem = jnp.dtype(compute_dtype).itemsize
    cost = pl.CostEstimate(
        flops=2 * b_pad * H * C + b_pad * C,
        transcendentals=0,
        bytes_accessed=b_pad * H * elem + H * C * elem + C * 4 + b_pad * C * 4,
    )

    out = pl.pallas_call(
        _ens3_kernel,
        out_shape=jax.ShapeDtypeStruct((b_pad, C), jnp.float32),
        grid=(num_tiles,),
        in_specs=[
            # Activations: tiled over batch, pipelined/double-buffered.
            pl.BlockSpec((tb, H), lambda i: (i, 0)),
            # Fused weight + bias: constant index_map -> stay VMEM-resident.
            pl.BlockSpec((H, C), lambda i: (0, 0)),
            pl.BlockSpec((1, C), lambda i: (0, 0)),
        ],
        out_specs=pl.BlockSpec((tb, C), lambda i: (i, 0)),
        compiler_params=pltpu.CompilerParams(
            dimension_semantics=("parallel",),      # megacore-shard batch axis
            vmem_limit_bytes=32 * 1024 * 1024,      # v5e scoped default is 16 MiB
        ),
        cost_estimate=cost,
    )(x_c, w_mean, b_mean)

    return out[:B] if b_pad != B else out


def _reference(x, w1, b1, w2, b2, w3, b3):
    hi = lax.Precision.HIGHEST
    y1 = jnp.dot(x, w1, precision=hi) + b1[None, :]
    y2 = jnp.dot(x, w2, precision=hi) + b2[None, :]
    y3 = jnp.dot(x, w3, precision=hi) + b3[None, :]
    return (y1 + y2 + y3) / 3.0


if __name__ == "__main__":
    key = jax.random.PRNGKey(0)
    k1, k2, k3, k4, k5, k6, k7 = jax.random.split(key, 7)

    # Lane/sublane-aligned shapes: batch=1024, hidden=128, classes=128
    # (batch sized so the default tile_b=512 yields a 2-step parallel grid).
    B, H, C = 1024, 128, 128

    # Deterministic synthetic parameters for the three ensemble members.
    w1 = jax.random.normal(k1, (H, C), dtype=jnp.float32) * 0.1
    w2 = jax.random.normal(k2, (H, C), dtype=jnp.float32) * 0.1
    w3 = jax.random.normal(k3, (H, C), dtype=jnp.float32) * 0.1
    b1 = jax.random.normal(k4, (C,), dtype=jnp.float32) * 0.1
    b2 = jax.random.normal(k5, (C,), dtype=jnp.float32) * 0.1
    b3 = jax.random.normal(k6, (C,), dtype=jnp.float32) * 0.1

    # Shared input for all three sub-models.
    x = jax.random.normal(k7, (B, H), dtype=jnp.float32)

    ref = _reference(x, w1, b1, w2, b2, w3, b3)

    # bf16-streamed path (default): half the HBM traffic, f32 accumulation.
    out_bf16 = ens_wrapper3(x, w1, b1, w2, b2, w3, b3)
    out_bf16 = jax.block_until_ready(out_bf16)
    assert out_bf16.shape == (B, C), out_bf16.shape
    assert jnp.allclose(out_bf16, ref, rtol=2e-2, atol=2e-2), float(
        jnp.max(jnp.abs(out_bf16 - ref)))

    # f32 path for a tighter numerical check of the fused-weight math.
    out_f32 = ens_wrapper3(x, w1, b1, w2, b2, w3, b3,
                           compute_dtype=jnp.float32)
    out_f32 = jax.block_until_ready(out_f32)
    assert jnp.allclose(out_f32, ref, rtol=1e-2, atol=1e-2), float(
        jnp.max(jnp.abs(out_f32 - ref)))

    print("KERNEL_OK")
</pallas_src>

<mosaic_0001>
module attributes {stable_mosaic.version = 11 : i64} {
  func.func @_ens3_kernel(%arg0: i32, %arg1: memref<512x128xbf16, #tpu.memory_space<vmem>>, %arg2: memref<128x128xbf16, #tpu.memory_space<vmem>>, %arg3: memref<1x128xf32, #tpu.memory_space<vmem>>, %arg4: memref<512x128xf32, #tpu.memory_space<vmem>>) attributes {dimension_semantics = [#tpu.dimension_semantics<parallel>], iteration_bounds = array<i64: 2>, scalar_prefetch = 0 : i64, scratch_operands = 0 : i64, tpu.core_type = #tpu.core_type<tc>, window_params = [{transform_indices = @transform_0, window_bounds = array<i64: 512, 128>}, {pipeline_mode = #tpu.pipeline_mode<synchronous>, transform_indices = @transform_1, window_bounds = array<i64: 128, 128>}, {pipeline_mode = #tpu.pipeline_mode<synchronous>, transform_indices = @transform_2, window_bounds = array<i64: 1, 128>}, {transform_indices = @transform_3, window_bounds = array<i64: 512, 128>}]} {
    %c0 = arith.constant 0 : index
    %c0_0 = arith.constant 0 : index
    %0 = vector.load %arg1[%c0, %c0_0] : memref<512x128xbf16, #tpu.memory_space<vmem>>, vector<512x128xbf16>
    %c0_1 = arith.constant 0 : index
    %c0_2 = arith.constant 0 : index
    %1 = vector.load %arg2[%c0_1, %c0_2] : memref<128x128xbf16, #tpu.memory_space<vmem>>, vector<128x128xbf16>
    %cst = arith.constant dense<0.000000e+00> : vector<512x128xf32>
    %2 = tpu.matmul %0, %1, %cst {dimension_numbers = #tpu.dot_dimension_numbers<[1], [0], [0], [1], [0, 0, 1, 1], [], []>} : vector<512x128xbf16>, vector<128x128xbf16>, vector<512x128xf32> -> vector<512x128xf32>
    %c0_3 = arith.constant 0 : index
    %c0_4 = arith.constant 0 : index
    %3 = vector.load %arg3[%c0_3, %c0_4] : memref<1x128xf32, #tpu.memory_space<vmem>>, vector<1x128xf32>
    %4 = vector.broadcast %3 : vector<1x128xf32> to vector<512x128xf32>
    %5 = arith.addf %2, %4 : vector<512x128xf32>
    %c0_5 = arith.constant 0 : index
    %c0_6 = arith.constant 0 : index
    %6 = vector.load %arg4[%c0_5, %c0_6] : memref<512x128xf32, #tpu.memory_space<vmem>>, vector<512x128xf32>
    tpu.vector_store %arg4[%c0_5, %c0_6], %5 {strides = array<i32>} : memref<512x128xf32, #tpu.memory_space<vmem>>, vector<512x128xf32>,
    return
  }
  func.func @transform_0(%arg0: i32) -> (i32, i32) {
    %c0_i32 = arith.constant 0 : i32
    %c0_i32_0 = arith.constant 0 : i32
    return %arg0, %c0_i32 : i32, i32
  }
  func.func @transform_1(%arg0: i32) -> (i32, i32) {
    %c0_i32 = arith.constant 0 : i32
    %c0_i32_0 = arith.constant 0 : i32
    %c0_i32_1 = arith.constant 0 : i32
    return %c0_i32, %c0_i32_0 : i32, i32
  }
  func.func @transform_2(%arg0: i32) -> (i32, i32) {
    %c0_i32 = arith.constant 0 : i32
    %c0_i32_0 = arith.constant 0 : i32
    %c0_i32_1 = arith.constant 0 : i32
    return %c0_i32, %c0_i32_0 : i32, i32
  }
  func.func @transform_3(%arg0: i32) -> (i32, i32) {
    %c0_i32 = arith.constant 0 : i32
    %c0_i32_0 = arith.constant 0 : i32
    return %arg0, %c0_i32 : i32, i32
  }
}

</mosaic_0001>

<llo_original>
// kernel: tpu_custom_call.1
$region0: #{tpu_custom_call.1}
  #allocation0 [shape = 'u32[]', space=smem, size = 0x4, offset = 0x4, fixed_abs, tag = 'smem constant byte address 0x4 - core index']
  #allocation1 [shape = 'u32[144,128]{1,0:T(1,128)}', space=vmem, size = 0x12000, scoped, tag = 'internal scratch']
  %s0 = inlined_call_operand.hbm [shape: bf16[1024,128], index: 0, kind: input, shape index: {}]
  %s1 = inlined_call_operand.hbm [shape: bf16[128,128], index: 1, kind: input, shape index: {}]
  %s2 = inlined_call_operand.vmem [shape: f32[1,128], index: 2, kind: input, shape index: {}]
  %s3 = inlined_call_operand.hbm [shape: f32[1024,128], index: 3, kind: output, shape index: {}]
  %s4 = sld [smem:[#allocation0]]
  $region53: #{tpu_custom_call.1} parent=0
    _
  %s6 = ssub.s32 1, %s4
  %s7 = scalar_select 0, %s6, %s4
  $region1: #{tpu_custom_call.1} parent=0
    #allocation2 [shape = 'u8[262144]{0}', space=vmem, size = 0x40000, scoped, tag = 'input window, operand 0']
    #allocation3 [shape = 's32[2]{0}', space=sflag, size = 0x8, scoped, tag = 'scoped memory for tpu_custom_call.1']
    #allocation4 [shape = 's32[2]{0}', space=sflag, size = 0x8, scoped, tag = 'scoped memory for tpu_custom_call.1']
    #allocation5 [shape = 'u8[32768]{0}', space=vmem, size = 0x8000, scoped, tag = 'input window, operand 1, single buffered']
    #allocation6 [shape = 's32[1]{0}', space=sflag, size = 0x4, scoped, tag = 'scoped memory for tpu_custom_call.1']
    #allocation7 [shape = 'u8[524288]{0}', space=vmem, size = 0x80000, scoped, tag = 'output window, operand 0']
    %8 = vsyncpa [#allocation3], 0
    %s9 = scalar_lea.sflag [#allocation3], 1
    %10 = vsyncpa %s9, 0
    %11 = vsyncpa [#allocation6], 0
    %12 = vsyncpa [#allocation4], 0
    %s13 = scalar_lea.sflag [#allocation4], 1
    %14 = vsyncpa %s13, 0
    loop: start=0, step=1, limit=4
    $region2: #{tpu_custom_call.1} parent=1 // loop_pre_header
      _
    $region3: #{tpu_custom_call.1} parent=1 // loop_header
      %s16 = sphi 0, %s20
      %p17 = scmp.ge.s32.totalorder %s16, 4
      %s26 = sphi 0, %s28
      %s29 = sphi 0, %s26
      %s30 = sphi 0, %s29
      %s46 = sphi 0, %s30
      %s50 = sphi 0, %s50
      %s52 = sphi 0, %s50
      %s53 = sphi 0, %s52
      %s67 = sphi 0, %s53
      %s71 = sphi 0, %s71
      %s73 = sphi 0, %s71
      %s74 = sphi 0, %s73
      %s88 = sphi 0, %s74
      %s94 = sphi 0, %s96
      %s97 = sphi 0, %s94
      %s98 = sphi 0, %s97
      %s114 = sphi 0, %s98
    $region4: #{tpu_custom_call.1} parent=1 // loop_header_branch
      %19 = sbr.rel (%p17) target = $region8
    $region5: #{tpu_custom_call.1} parent=1 // loop_body
      %s21 = ssub.s32 %s16, 1
      %s22 = ssub.s32 %s16, 2
      %s23 = sadd.s32 %s16, 1
      %s24 = ssub.s32 %s16, %s23
      %p25 = scmp.eq.s32.totalorder %s24, 0
      %s27 = sadd.s32 %s26, 1
      %s28 = scalar_select %p25, %s26, %s27
      %p31 = pneg %p25
      %p32 = scmp.eq.s32.totalorder %s16, 1
      %p33 = por %p31, %p32
      %p34 = scmp.ne.s32.totalorder %s26, %s29
      %p35 = scmp.eq.s32.totalorder %s16, 0
      %p36 = por %p34, %p35
      %p37 = scmp.ne.s32.totalorder %s26, %s29
      %p38 = scmp.eq.s32.totalorder %s21, 1
      %p39 = por %p37, %p38
      %p40 = scmp.ne.s32.totalorder %s29, %s30
      %p41 = scmp.eq.s32.totalorder %s21, 0
      %p42 = por %p40, %p41
      %p43 = scmp.ne.s32.totalorder %s29, %s30
      %p44 = scmp.eq.s32.totalorder %s22, 1
      %p45 = por %p43, %p44
      %p47 = scmp.ne.s32.totalorder %s30, %s46
      %p48 = scmp.eq.s32.totalorder %s22, 0
      %p49 = por %p47, %p48
      %s51 = sadd.s32 %s50, 1
      %p54 = scmp.eq.s32.totalorder %s16, 1
      %p55 = scmp.ne.s32.totalorder %s50, %s52
      %p56 = scmp.eq.s32.totalorder %s16, 0
      %p57 = por %p55, %p56
      %p58 = scmp.ne.s32.totalorder %s50, %s52
      %p59 = scmp.eq.s32.totalorder %s21, 1
      %p60 = por %p58, %p59
      %p61 = scmp.ne.s32.totalorder %s52, %s53
      %p62 = scmp.eq.s32.totalorder %s21, 0
      %p63 = por %p61, %p62
      %p64 = scmp.ne.s32.totalorder %s52, %s53
      %p65 = scmp.eq.s32.totalorder %s22, 1
      %p66 = por %p64, %p65
      %p68 = scmp.ne.s32.totalorder %s53, %s67
      %p69 = scmp.eq.s32.totalorder %s22, 0
      %p70 = por %p68, %p69
      %s72 = sadd.s32 %s71, 1
      %p75 = scmp.eq.s32.totalorder %s16, 1
      %p76 = scmp.ne.s32.totalorder %s71, %s73
      %p77 = scmp.eq.s32.totalorder %s16, 0
      %p78 = por %p76, %p77
      %p79 = scmp.ne.s32.totalorder %s71, %s73
      %p80 = scmp.eq.s32.totalorder %s21, 1
      %p81 = por %p79, %p80
      %p82 = scmp.ne.s32.totalorder %s73, %s74
      %p83 = scmp.eq.s32.totalorder %s21, 0
      %p84 = por %p82, %p83
      %p85 = scmp.ne.s32.totalorder %s73, %s74
      %p86 = scmp.eq.s32.totalorder %s22, 1
      %p87 = por %p85, %p86
      %p89 = scmp.ne.s32.totalorder %s74, %s88
      %p90 = scmp.eq.s32.totalorder %s22, 0
      %p91 = por %p89, %p90
      %s92 = ssub.s32 %s16, %s23
      %p93 = scmp.eq.s32.totalorder %s92, 0
      %s95 = sadd.s32 %s94, 1
      %s96 = scalar_select %p93, %s94, %s95
      %p99 = pneg %p93
      %p100 = scmp.eq.s32.totalorder %s16, 1
      %p101 = por %p99, %p100
      %p102 = scmp.ne.s32.totalorder %s94, %s97
      %p103 = scmp.eq.s32.totalorder %s16, 0
      %p104 = por %p102, %p103
      %p105 = scmp.ne.s32.totalorder %s94, %s97
      %p106 = scmp.eq.s32.totalorder %s21, 1
      %p107 = por %p105, %p106
      %p108 = scmp.ne.s32.totalorder %s97, %s98
      %p109 = scmp.eq.s32.totalorder %s21, 0
      %p110 = por %p108, %p109
      %p111 = scmp.ne.s32.totalorder %s97, %s98
      %p112 = scmp.eq.s32.totalorder %s22, 1
      %p113 = por %p111, %p112
      %p115 = scmp.ne.s32.totalorder %s98, %s114
      %p116 = scmp.eq.s32.totalorder %s22, 0
      %p117 = por %p115, %p116
      %p118 = scmp.le.s32.totalorder 1, %s16
      %p119 = scmp.lt.s32.totalorder %s16, 3
      %p120 = pnand %p118, %p119
      %p121 = pneg %p120
      // Predicated region
      $region9: #{tpu_custom_call.1} parent=5 // pred_check
        _
      $region10: #{tpu_custom_call.1} parent=5 // pred_check_branch
        %123 = sbr.rel (%p120) target = $region12
      $region11: #{tpu_custom_call.1} parent=5 // pred_region
        %s124 = ssub.s32 %s16, 1
        // Predicated region
        $region13: #{tpu_custom_call.1} parent=11 // pred_check
          %p125 = pneg %p63
        $region14: #{tpu_custom_call.1} parent=11 // pred_check_branch
          %127 = sbr.rel (%p125) target = $region16
        $region15: #{tpu_custom_call.1} parent=11 // pred_region
          %s129 = ssub.s32 1024, 1024
          %130 = vsyncadd [#allocation6], %s129
          %s131 = sshll.u32 [#allocation5], 4
          %s132 = int_to_ptr.vmem [resolvable:$true] %s131
          %137 = dma.hbm_to_vmem [thread:$0]  %s1, 1024, %s132, [#allocation6], 64, 64, 4
        $region16: #{tpu_custom_call.1} parent=11 // pred_fallthru
          _
        // Predicated region
        $region17: #{tpu_custom_call.1} parent=11 // pred_check
          %p138 = pneg %p84
        $region18: #{tpu_custom_call.1} parent=11 // pred_check_branch
          %140 = sbr.rel (%p138) target = $region20
        $region19: #{tpu_custom_call.1} parent=11 // pred_region
          _
        $region20: #{tpu_custom_call.1} parent=11 // pred_fallthru
          _
      $region12: #{tpu_custom_call.1} parent=5 // pred_fallthru
        _
      %p141 = scmp.lt.s32.totalorder %s16, 2
      // Predicated region
      $region21: #{tpu_custom_call.1} parent=5 // pred_check
        %p142 = pneg %p141
      $region22: #{tpu_custom_call.1} parent=5 // pred_check_branch
        %144 = sbr.rel (%p142) target = $region24
      $region23: #{tpu_custom_call.1} parent=5 // pred_region
        // Predicated region
        $region25: #{tpu_custom_call.1} parent=23 // pred_check
          %p145 = pneg %p36
        $region26: #{tpu_custom_call.1} parent=23 // pred_check_branch
          %147 = sbr.rel (%p145) target = $region28
        $region27: #{tpu_custom_call.1} parent=23 // pred_region
          %s148 = sand.u32 %s26, 1
          %s149 = scalar_lea.sflag [#allocation3], %s148
          %s150 = sand.u32 %s26, 1
          %s151 = smul.addr %s150, 256
          %s152 = scalar_lea.vmem [#allocation2], %s151
          %s153 = smul.u32 64, %s16
          %s155 = ssub.s32 4096, 4096
          %156 = vsyncadd %s149, %s155
          %s157 = smul.addr %s153, 64
          %s158 = scalar_lea.hbm %s0, %s157
          %s159 = sshll.u32 %s152, 4
          %s160 = int_to_ptr.vmem [resolvable:$true] %s159
          %165 = dma.hbm_to_vmem [thread:$0]  %s158, 4096, %s160, %s149, 64, 64, 4
        $region28: #{tpu_custom_call.1} parent=23 // pred_fallthru
          _
      $region24: #{tpu_custom_call.1} parent=5 // pred_fallthru
        _
      %p166 = scmp.le.s32.totalorder 1, %s16
      %p167 = scmp.lt.s32.totalorder %s16, 3
      %p168 = pnand %p166, %p167
      %p169 = pneg %p168
      // Predicated region
      $region29: #{tpu_custom_call.1} parent=5 // pred_check
        _
      $region30: #{tpu_custom_call.1} parent=5 // pred_check_branch
        %171 = sbr.rel (%p168) target = $region32
      $region31: #{tpu_custom_call.1} parent=5 // pred_region
        %s172 = ssub.s32 %s16, 1
        %s173 = sand.u32 %s29, 1
        %s174 = scalar_lea.sflag [#allocation3], %s173
        %s175 = sand.u32 %s29, 1
        %s176 = smul.addr %s175, 256
        %s177 = scalar_lea.vmem [#allocation2], %s176
        // Predicated region
        $region33: #{tpu_custom_call.1} parent=31 // pred_check
          %p178 = pneg %p42
        $region34: #{tpu_custom_call.1} parent=31 // pred_check_branch
          %180 = sbr.rel (%p178) target = $region36
        $region35: #{tpu_custom_call.1} parent=31 // pred_region
          %181 = dma.done %s174, 4096
        $region36: #{tpu_custom_call.1} parent=31 // pred_fallthru
          _
        // Predicated region
        $region37: #{tpu_custom_call.1} parent=31 // pred_check
          %p182 = pneg %p63
        $region38: #{tpu_custom_call.1} parent=31 // pred_check_branch
          %184 = sbr.rel (%p182) target = $region40
        $region39: #{tpu_custom_call.1} parent=31 // pred_region
          %185 = dma.done [#allocation6], 1024
        $region40: #{tpu_custom_call.1} parent=31 // pred_fallthru
          _
        %s186 = sand.u32 %s29, 1
        %s187 = scalar_lea.sflag [#allocation3], %s186
        %s188 = sand.u32 %s29, 1
        %s189 = smul.addr %s188, 256
        %s190 = scalar_lea.vmem [#allocation2], %s189
        %p191 = pneg %p42
        %p192 = pneg %p39
        %p193 = pneg %p63
        %p194 = pneg %p60
        %p195 = pneg %p84
        %p196 = pneg %p81
        %p197 = pneg %p110
        %p198 = pneg %p107
        %s199 = sand.u32 %s97, 1
        %s200 = scalar_lea.sflag [#allocation4], %s199
        %s201 = sand.u32 %s97, 1
        %s202 = smul.addr %s201, 512
        %s203 = scalar_lea.vmem [#allocation7], %s202
        %s204 = smul.u32 64, %s21
        %s205 = smul.u32 64, %s21
        %v207 = vld [vmem:[%s177] sm:$0xf]
        %v208 = vld [vmem:[%s177 + $0x4] sm:$0xf]
        %v209 = vld [vmem:[%s177 + $0x8] sm:$0xf]
        %v210 = vld [vmem:[%s177 + $0xc] sm:$0xf]
        %v211 = vld [vmem:[%s177 + $0x10] sm:$0xf]
        %v212 = vld [vmem:[%s177 + $0x14] sm:$0xf]
        %v213 = vld [vmem:[%s177 + $0x18] sm:$0xf]
        %v214 = vld [vmem:[%s177 + $0x1c] sm:$0xf]
        %v215 = vld [vmem:[%s177 + $0x20] sm:$0xf]
        %v216 = vld [vmem:[%s177 + $0x24] sm:$0xf]
        %v217 = vld [vmem:[%s177 + $0x28] sm:$0xf]
        %v218 = vld [vmem:[%s177 + $0x2c] sm:$0xf]
        %v219 = vld [vmem:[%s177 + $0x30] sm:$0xf]
        %v220 = vld [vmem:[%s177 + $0x34] sm:$0xf]
        %v221 = vld [vmem:[%s177 + $0x38] sm:$0xf]
        %v222 = vld [vmem:[%s177 + $0x3c] sm:$0xf]
        %v223 = vld [vmem:[%s177 + $0x40] sm:$0xf]
        %v224 = vld [vmem:[%s177 + $0x44] sm:$0xf]
        %v225 = vld [vmem:[%s177 + $0x48] sm:$0xf]
        %v226 = vld [vmem:[%s177 + $0x4c] sm:$0xf]
        %v227 = vld [vmem:[%s177 + $0x50] sm:$0xf]
        %v228 = vld [vmem:[%s177 + $0x54] sm:$0xf]
        %v229 = vld [vmem:[%s177 + $0x58] sm:$0xf]
        %v230 = vld [vmem:[%s177 + $0x5c] sm:$0xf]
        %v231 = vld [vmem:[%s177 + $0x60] sm:$0xf]
        %v232 = vld [vmem:[%s177 + $0x64] sm:$0xf]
        %v233 = vld [vmem:[%s177 + $0x68] sm:$0xf]
        %v234 = vld [vmem:[%s177 + $0x6c] sm:$0xf]
        %v235 = vld [vmem:[%s177 + $0x70] sm:$0xf]
        %v236 = vld [vmem:[%s177 + $0x74] sm:$0xf]
        %v237 = vld [vmem:[%s177 + $0x78] sm:$0xf]
        %v238 = vld [vmem:[%s177 + $0x7c] sm:$0xf]
        %v239 = vld [vmem:[%s177 + $0x80] sm:$0xf]
        %v240 = vld [vmem:[%s177 + $0x84] sm:$0xf]
        %v241 = vld [vmem:[%s177 + $0x88] sm:$0xf]
        %v242 = vld [vmem:[%s177 + $0x8c] sm:$0xf]
        %v243 = vld [vmem:[%s177 + $0x90] sm:$0xf]
        %v244 = vld [vmem:[%s177 + $0x94] sm:$0xf]
        %v245 = vld [vmem:[%s177 + $0x98] sm:$0xf]
        %v246 = vld [vmem:[%s177 + $0x9c] sm:$0xf]
        %v247 = vld [vmem:[%s177 + $0xa0] sm:$0xf]
        %v248 = vld [vmem:[%s177 + $0xa4] sm:$0xf]
        %v249 = vld [vmem:[%s177 + $0xa8] sm:$0xf]
        %v250 = vld [vmem:[%s177 + $0xac] sm:$0xf]
        %v251 = vld [vmem:[%s177 + $0xb0] sm:$0xf]
        %v252 = vld [vmem:[%s177 + $0xb4] sm:$0xf]
        %v253 = vld [vmem:[%s177 + $0xb8] sm:$0xf]
        %v254 = vld [vmem:[%s177 + $0xbc] sm:$0xf]
        %v255 = vld [vmem:[%s177 + $0xc0] sm:$0xf]
        %v256 = vld [vmem:[%s177 + $0xc4] sm:$0xf]
        %v257 = vld [vmem:[%s177 + $0xc8] sm:$0xf]
        %v258 = vld [vmem:[%s177 + $0xcc] sm:$0xf]
        %v259 = vld [vmem:[%s177 + $0xd0] sm:$0xf]
        %v260 = vld [vmem:[%s177 + $0xd4] sm:$0xf]
        %v261 = vld [vmem:[%s177 + $0xd8] sm:$0xf]
        %v262 = vld [vmem:[%s177 + $0xdc] sm:$0xf]
        %v263 = vld [vmem:[%s177 + $0xe0] sm:$0xf]
        %v264 = vld [vmem:[%s177 + $0xe4] sm:$0xf]
        %v265 = vld [vmem:[%s177 + $0xe8] sm:$0xf]
        %v266 = vld [vmem:[%s177 + $0xec] sm:$0xf]
        %v267 = vld [vmem:[%s177 + $0xf0] sm:$0xf]
        %v268 = vld [vmem:[%s177 + $0xf4] sm:$0xf]
        %v269 = vld [vmem:[%s177 + $0xf8] sm:$0xf]
        %v270 = vld [vmem:[%s177 + $0xfc] sm:$0xf]
        %v271 = vld [vmem:[#allocation5] sm:$0xf]
        %v272 = vld [vmem:[#allocation5 + $0x4] sm:$0xf]
        %v273 = vld [vmem:[#allocation5 + $0x8] sm:$0xf]
        %v274 = vld [vmem:[#allocation5 + $0xc] sm:$0xf]
        %v275 = vld [vmem:[#allocation5 + $0x10] sm:$0xf]
        %v276 = vld [vmem:[#allocation5 + $0x14] sm:$0xf]
        %v277 = vld [vmem:[#allocation5 + $0x18] sm:$0xf]
        %v278 = vld [vmem:[#allocation5 + $0x1c] sm:$0xf]
        %v279 = vld [vmem:[#allocation5 + $0x20] sm:$0xf]
        %v280 = vld [vmem:[#allocation5 + $0x24] sm:$0xf]
        %v281 = vld [vmem:[#allocation5 + $0x28] sm:$0xf]
        %v282 = vld [vmem:[#allocation5 + $0x2c] sm:$0xf]
        %v283 = vld [vmem:[#allocation5 + $0x30] sm:$0xf]
        %v284 = vld [vmem:[#allocation5 + $0x34] sm:$0xf]
        %v285 = vld [vmem:[#allocation5 + $0x38] sm:$0xf]
        %v286 = vld [vmem:[#allocation5 + $0x3c] sm:$0xf]
        %v287 = vld [vmem:[%s2] sm:$0x1]
        %v289 = vlaneseq
        %v290 = vshrl.u32 %v289, 7
        %v291 = vsub.s32 0, %v290
        %v292 = vrot.slane %v287, %v291
        %v358 = vunpack.c.l.b16 %v207
        %v359 = vunpack.c.l.b16 %v208
        %v360 = vunpack.c.l.b16 %v209
        %v361 = vunpack.c.l.b16 %v210
        %v362 = vunpack.c.l.b16 %v211
        %v363 = vunpack.c.l.b16 %v212
        %v364 = vunpack.c.l.b16 %v213
        %v365 = vunpack.c.l.b16 %v214
        %v366 = vunpack.c.l.b16 %v215
        %v367 = vunpack.c.l.b16 %v216
        %v368 = vunpack.c.l.b16 %v217
        %v369 = vunpack.c.l.b16 %v218
        %v370 = vunpack.c.l.b16 %v219
        %v371 = vunpack.c.l.b16 %v220
        %v372 = vunpack.c.l.b16 %v221
        %v373 = vunpack.c.l.b16 %v222
        %v374 = vunpack.c.l.b16 %v223
        %v375 = vunpack.c.l.b16 %v224
        %v376 = vunpack.c.l.b16 %v225
        %v377 = vunpack.c.l.b16 %v226
        %v378 = vunpack.c.l.b16 %v227
        %v379 = vunpack.c.l.b16 %v228
        %v380 = vunpack.c.l.b16 %v229
        %v381 = vunpack.c.l.b16 %v230
        %v382 = vunpack.c.l.b16 %v231
        %v383 = vunpack.c.l.b16 %v232
        %v384 = vunpack.c.l.b16 %v233
        %v385 = vunpack.c.l.b16 %v234
        %v386 = vunpack.c.l.b16 %v235
        %v387 = vunpack.c.l.b16 %v236
        %v388 = vunpack.c.l.b16 %v237
        %v389 = vunpack.c.l.b16 %v238
        %v390 = vunpack.c.l.b16 %v239
        %v391 = vunpack.c.l.b16 %v240
        %v392 = vunpack.c.l.b16 %v241
        %v393 = vunpack.c.l.b16 %v242
        %v394 = vunpack.c.l.b16 %v243
        %v395 = vunpack.c.l.b16 %v244
        %v396 = vunpack.c.l.b16 %v245
        %v397 = vunpack.c.l.b16 %v246
        %v398 = vunpack.c.l.b16 %v247
        %v399 = vunpack.c.l.b16 %v248
        %v400 = vunpack.c.l.b16 %v249
        %v401 = vunpack.c.l.b16 %v250
        %v402 = vunpack.c.l.b16 %v251
        %v403 = vunpack.c.l.b16 %v252
        %v404 = vunpack.c.l.b16 %v253
        %v405 = vunpack.c.l.b16 %v254
        %v406 = vunpack.c.l.b16 %v255
        %v407 = vunpack.c.l.b16 %v256
        %v408 = vunpack.c.l.b16 %v257
        %v409 = vunpack.c.l.b16 %v258
        %v410 = vunpack.c.l.b16 %v259
        %v411 = vunpack.c.l.b16 %v260
        %v412 = vunpack.c.l.b16 %v261
        %v413 = vunpack.c.l.b16 %v262
        %v414 = vunpack.c.l.b16 %v263
        %v415 = vunpack.c.l.b16 %v264
        %v416 = vunpack.c.l.b16 %v265
        %v417 = vunpack.c.l.b16 %v266
        %v418 = vunpack.c.l.b16 %v267
        %v419 = vunpack.c.l.b16 %v268
        %v420 = vunpack.c.l.b16 %v269
        %v421 = vunpack.c.l.b16 %v270
        %v422 = vpack.c.b16 %v359, %v358
        %v423 = vpack.c.b16 %v361, %v360
        %v424 = vpack.c.b16 %v363, %v362
        %v425 = vpack.c.b16 %v365, %v364
        %v426 = vpack.c.b16 %v367, %v366
        %v427 = vpack.c.b16 %v369, %v368
        %v428 = vpack.c.b16 %v371, %v370
        %v429 = vpack.c.b16 %v373, %v372
        %v430 = vpack.c.b16 %v375, %v374
        %v431 = vpack.c.b16 %v377, %v376
        %v432 = vpack.c.b16 %v379, %v378
        %v433 = vpack.c.b16 %v381, %v380
        %v434 = vpack.c.b16 %v383, %v382
        %v435 = vpack.c.b16 %v385, %v384
        %v436 = vpack.c.b16 %v387, %v386
        %v437 = vpack.c.b16 %v389, %v388
        %v438 = vpack.c.b16 %v391, %v390
        %v439 = vpack.c.b16 %v393, %v392
        %v440 = vpack.c.b16 %v395, %v394
        %v441 = vpack.c.b16 %v397, %v396
        %v442 = vpack.c.b16 %v399, %v398
        %v443 = vpack.c.b16 %v401, %v400
        %v444 = vpack.c.b16 %v403, %v402
        %v445 = vpack.c.b16 %v405, %v404
        %v446 = vpack.c.b16 %v407, %v406
        %v447 = vpack.c.b16 %v409, %v408
        %v448 = vpack.c.b16 %v411, %v410
        %v449 = vpack.c.b16 %v413, %v412
        %v450 = vpack.c.b16 %v415, %v414
        %v451 = vpack.c.b16 %v417, %v416
        %v452 = vpack.c.b16 %v419, %v418
        %v453 = vpack.c.b16 %v421, %v420
        %v502 = vunpack.c.l.b16 %v271
        %v503 = vunpack.c.l.b16 %v272
        %v504 = vunpack.c.l.b16 %v273
        %v505 = vunpack.c.l.b16 %v274
        %v506 = vunpack.c.l.b16 %v275
        %v507 = vunpack.c.l.b16 %v276
        %v508 = vunpack.c.l.b16 %v277
        %v509 = vunpack.c.l.b16 %v278
        %v510 = vunpack.c.l.b16 %v279
        %v511 = vunpack.c.l.b16 %v280
        %v512 = vunpack.c.l.b16 %v281
        %v513 = vunpack.c.l.b16 %v282
        %v514 = vunpack.c.l.b16 %v283
        %v515 = vunpack.c.l.b16 %v284
        %v516 = vunpack.c.l.b16 %v285
        %v517 = vunpack.c.l.b16 %v286
        %v518 = vpack.c.b16 %v503, %v502
        %v519 = vpack.c.b16 %v505, %v504
        %v520 = vpack.c.b16 %v507, %v506
        %v521 = vpack.c.b16 %v509, %v508
        %v522 = vpack.c.b16 %v511, %v510
        %v523 = vpack.c.b16 %v513, %v512
        %v524 = vpack.c.b16 %v515, %v514
        %v525 = vpack.c.b16 %v517, %v516
        %534 = vmatprep.subr.bf16.mxu0 0
        %535 = vmatpush1.bf16.msra.mxu0 %v525
        %536 = vmatprep.subr.bf16.mxu0 0
        %537 = vmatpush1.bf16.msra.mxu0 %v524
        %538 = vmatprep.subr.bf16.mxu0 0
        %539 = vmatpush1.bf16.msra.mxu0 %v523
        %540 = vmatprep.subr.bf16.mxu0 0
        %541 = vmatpush1.bf16.msra.mxu0 %v522
        %542 = vmatprep.subr.bf16.mxu0 0
        %543 = vmatpush1.bf16.msra.mxu0 %v521
        %544 = vmatprep.subr.bf16.mxu0 0
        %545 = vmatpush1.bf16.msra.mxu0 %v520
        %546 = vmatprep.subr.bf16.mxu0 0
        %547 = vmatpush1.bf16.msra.mxu0 %v519
        %548 = vmatprep.subr.bf16.mxu0 0
        %549 = vmatpush1.bf16.msra.mxu0 %v518
        %550 = vmatprep.subr.bf16.mxu0 0
        %551 = vmatpush2.bf16.msra.mxu0 0
        %552 = vmatprep.subr.bf16.mxu0 0
        %553 = vmatpush2.bf16.msra.mxu0 0
        %554 = vmatprep.subr.bf16.mxu0 0
        %555 = vmatpush2.bf16.msra.mxu0 0
        %556 = vmatprep.subr.bf16.mxu0 0
        %557 = vmatpush2.bf16.msra.mxu0 0
        %558 = vmatprep.subr.bf16.mxu0 0
        %559 = vmatpush2.bf16.msra.mxu0 0
        %560 = vmatprep.subr.bf16.mxu0 0
        %561 = vmatpush2.bf16.msra.mxu0 0
        %562 = vmatprep.subr.bf16.mxu0 0
        %563 = vmatpush2.bf16.msra.mxu0 0
        %564 = vmatprep.subr.bf16.mxu0 0
        %565 = vmatpush2.bf16.msra.mxu0 0
        %566 = vmatprep.mubr.bf16.mxu0 0
        %567 = vmatmul.mubr.bf16.gmra.mxu0 %v422
        %v568 = vpop.f32.mrf.mxu0
        %v569 = vadd.f32 %v292, %v568
        %v570 = vpop.f32.mrf.mxu0
        %v571 = vpop.f32.mrf.mxu0
        %v572 = vadd.f32 %v292, %v571
        %v573 = vpop.f32.mrf.mxu0
        %574 = vmatprep.mubr.bf16.mxu0 0
        %575 = vmatmul.mubr.bf16.gmra.mxu0 %v423
        %v576 = vpop.f32.mrf.mxu0
        %v577 = vadd.f32 %v292, %v576
        %v578 = vpop.f32.mrf.mxu0
        %v579 = vpop.f32.mrf.mxu0
        %v580 = vadd.f32 %v292, %v579
        %v581 = vpop.f32.mrf.mxu0
        %582 = vmatprep.mubr.bf16.mxu0 0
        %583 = vmatmul.mubr.bf16.gmra.mxu0 %v424
        %v584 = vpop.f32.mrf.mxu0
        %v585 = vadd.f32 %v292, %v584
        %v586 = vpop.f32.mrf.mxu0
        %v587 = vpop.f32.mrf.mxu0
        %v588 = vadd.f32 %v292, %v587
        %v589 = vpop.f32.mrf.mxu0
        %590 = vmatprep.mubr.bf16.mxu0 0
        %591 = vmatmul.mubr.bf16.gmra.mxu0 %v425
        %v592 = vpop.f32.mrf.mxu0
        %v593 = vadd.f32 %v292, %v592
        %v594 = vpop.f32.mrf.mxu0
        %v595 = vpop.f32.mrf.mxu0
        %v596 = vadd.f32 %v292, %v595
        %v597 = vpop.f32.mrf.mxu0
        %598 = vmatprep.mubr.bf16.mxu0 0
        %599 = vmatmul.mubr.bf16.gmra.mxu0 %v426
        %v600 = vpop.f32.mrf.mxu0
        %v601 = vadd.f32 %v292, %v600
        %v602 = vpop.f32.mrf.mxu0
        %v603 = vpop.f32.mrf.mxu0
        %v604 = vadd.f32 %v292, %v603
        %v605 = vpop.f32.mrf.mxu0
        %606 = vmatprep.mubr.bf16.mxu0 0
        %607 = vmatmul.mubr.bf16.gmra.mxu0 %v427
        %v608 = vpop.f32.mrf.mxu0
        %v609 = vadd.f32 %v292, %v608
        %v610 = vpop.f32.mrf.mxu0
        %v611 = vpop.f32.mrf.mxu0
        %v612 = vadd.f32 %v292, %v611
        %v613 = vpop.f32.mrf.mxu0
        %614 = vmatprep.mubr.bf16.mxu0 0
        %615 = vmatmul.mubr.bf16.gmra.mxu0 %v428
        %v616 = vpop.f32.mrf.mxu0
        %v617 = vadd.f32 %v292, %v616
        %v618 = vpop.f32.mrf.mxu0
        %v619 = vpop.f32.mrf.mxu0
        %v620 = vadd.f32 %v292, %v619
        %v621 = vpop.f32.mrf.mxu0
        %622 = vmatprep.mubr.bf16.mxu0 0
        %623 = vmatmul.mubr.bf16.gmra.mxu0 %v429
        %v624 = vpop.f32.mrf.mxu0
        %v625 = vadd.f32 %v292, %v624
        %v626 = vpop.f32.mrf.mxu0
        %v627 = vpop.f32.mrf.mxu0
        %v628 = vadd.f32 %v292, %v627
        %v629 = vpop.f32.mrf.mxu0
        %630 = vmatprep.mubr.bf16.mxu0 0
        %631 = vmatmul.mubr.bf16.gmra.mxu0 %v430
        %v632 = vpop.f32.mrf.mxu0
        %v633 = vadd.f32 %v292, %v632
        %v634 = vpop.f32.mrf.mxu0
        %v635 = vpop.f32.mrf.mxu0
        %v636 = vadd.f32 %v292, %v635
        %v637 = vpop.f32.mrf.mxu0
        %638 = vmatprep.mubr.bf16.mxu0 0
        %639 = vmatmul.mubr.bf16.gmra.mxu0 %v431
        %v640 = vpop.f32.mrf.mxu0
        %v641 = vadd.f32 %v292, %v640
        %v642 = vpop.f32.mrf.mxu0
        %v643 = vpop.f32.mrf.mxu0
        %v644 = vadd.f32 %v292, %v643
        %v645 = vpop.f32.mrf.mxu0
        %646 = vmatprep.mubr.bf16.mxu0 0
        %647 = vmatmul.mubr.bf16.gmra.mxu0 %v432
        %v648 = vpop.f32.mrf.mxu0
        %v649 = vadd.f32 %v292, %v648
        %v650 = vpop.f32.mrf.mxu0
        %v651 = vpop.f32.mrf.mxu0
        %v652 = vadd.f32 %v292, %v651
        %v653 = vpop.f32.mrf.mxu0
        %654 = vmatprep.mubr.bf16.mxu0 0
        %655 = vmatmul.mubr.bf16.gmra.mxu0 %v433
        %v656 = vpop.f32.mrf.mxu0
        %v657 = vadd.f32 %v292, %v656
        %v658 = vpop.f32.mrf.mxu0
        %v659 = vpop.f32.mrf.mxu0
        %v660 = vadd.f32 %v292, %v659
        %v661 = vpop.f32.mrf.mxu0
        %662 = vmatprep.mubr.bf16.mxu0 0
        %663 = vmatmul.mubr.bf16.gmra.mxu0 %v434
        %v664 = vpop.f32.mrf.mxu0
        %v665 = vadd.f32 %v292, %v664
        %v666 = vpop.f32.mrf.mxu0
        %v667 = vpop.f32.mrf.mxu0
        %v668 = vadd.f32 %v292, %v667
        %v669 = vpop.f32.mrf.mxu0
        %670 = vmatprep.mubr.bf16.mxu0 0
        %671 = vmatmul.mubr.bf16.gmra.mxu0 %v435
        %v672 = vpop.f32.mrf.mxu0
        %v673 = vadd.f32 %v292, %v672
        %v674 = vpop.f32.mrf.mxu0
        %v675 = vpop.f32.mrf.mxu0
        %v676 = vadd.f32 %v292, %v675
        %v677 = vpop.f32.mrf.mxu0
        %678 = vmatprep.mubr.bf16.mxu0 0
        %679 = vmatmul.mubr.bf16.gmra.mxu0 %v436
        %v680 = vpop.f32.mrf.mxu0
        %v681 = vadd.f32 %v292, %v680
        %v682 = vpop.f32.mrf.mxu0
        %v683 = vpop.f32.mrf.mxu0
        %v684 = vadd.f32 %v292, %v683
        %v685 = vpop.f32.mrf.mxu0
        %686 = vmatprep.mubr.bf16.mxu0 0
        %687 = vmatmul.mubr.bf16.gmra.mxu0 %v437
        %v688 = vpop.f32.mrf.mxu0
        %v689 = vadd.f32 %v292, %v688
        %v690 = vpop.f32.mrf.mxu0
        %v691 = vpop.f32.mrf.mxu0
        %v692 = vadd.f32 %v292, %v691
        %v693 = vpop.f32.mrf.mxu0
        %694 = vmatprep.mubr.bf16.mxu0 0
        %695 = vmatmul.mubr.bf16.gmra.mxu0 %v438
        %v696 = vpop.f32.mrf.mxu0
        %v697 = vadd.f32 %v292, %v696
        %v698 = vpop.f32.mrf.mxu0
        %v699 = vpop.f32.mrf.mxu0
        %v700 = vadd.f32 %v292, %v699
        %v701 = vpop.f32.mrf.mxu0
        %702 = vmatprep.mubr.bf16.mxu0 0
        %703 = vmatmul.mubr.bf16.gmra.mxu0 %v439
        %v704 = vpop.f32.mrf.mxu0
        %v705 = vadd.f32 %v292, %v704
        %v706 = vpop.f32.mrf.mxu0
        %v707 = vpop.f32.mrf.mxu0
        %v708 = vadd.f32 %v292, %v707
        %v709 = vpop.f32.mrf.mxu0
        %710 = vmatprep.mubr.bf16.mxu0 0
        %711 = vmatmul.mubr.bf16.gmra.mxu0 %v440
        %v712 = vpop.f32.mrf.mxu0
        %v713 = vadd.f32 %v292, %v712
        %v714 = vpop.f32.mrf.mxu0
        %v715 = vpop.f32.mrf.mxu0
        %v716 = vadd.f32 %v292, %v715
        %v717 = vpop.f32.mrf.mxu0
        %718 = vmatprep.mubr.bf16.mxu0 0
        %719 = vmatmul.mubr.bf16.gmra.mxu0 %v441
        %v720 = vpop.f32.mrf.mxu0
        %v721 = vadd.f32 %v292, %v720
        %v722 = vpop.f32.mrf.mxu0
        %v723 = vpop.f32.mrf.mxu0
        %v724 = vadd.f32 %v292, %v723
        %v725 = vpop.f32.mrf.mxu0
        %726 = vmatprep.mubr.bf16.mxu0 0
        %727 = vmatmul.mubr.bf16.gmra.mxu0 %v442
        %v728 = vpop.f32.mrf.mxu0
        %v729 = vadd.f32 %v292, %v728
        %v730 = vpop.f32.mrf.mxu0
        %v731 = vpop.f32.mrf.mxu0
        %v732 = vadd.f32 %v292, %v731
        %v733 = vpop.f32.mrf.mxu0
        %734 = vmatprep.mubr.bf16.mxu0 0
        %735 = vmatmul.mubr.bf16.gmra.mxu0 %v443
        %v736 = vpop.f32.mrf.mxu0
        %v737 = vadd.f32 %v292, %v736
        %v738 = vpop.f32.mrf.mxu0
        %v739 = vpop.f32.mrf.mxu0
        %v740 = vadd.f32 %v292, %v739
        %v741 = vpop.f32.mrf.mxu0
        %742 = vmatprep.mubr.bf16.mxu0 0
        %743 = vmatmul.mubr.bf16.gmra.mxu0 %v444
        %v744 = vpop.f32.mrf.mxu0
        %v745 = vadd.f32 %v292, %v744
        %v746 = vpop.f32.mrf.mxu0
        %v747 = vpop.f32.mrf.mxu0
        %v748 = vadd.f32 %v292, %v747
        %v749 = vpop.f32.mrf.mxu0
        %750 = vmatprep.mubr.bf16.mxu0 0
        %751 = vmatmul.mubr.bf16.gmra.mxu0 %v445
        %v752 = vpop.f32.mrf.mxu0
        %v753 = vadd.f32 %v292, %v752
        %v754 = vpop.f32.mrf.mxu0
        %v755 = vpop.f32.mrf.mxu0
        %v756 = vadd.f32 %v292, %v755
        %v757 = vpop.f32.mrf.mxu0
        %758 = vmatprep.mubr.bf16.mxu0 0
        %759 = vmatmul.mubr.bf16.gmra.mxu0 %v446
        %v760 = vpop.f32.mrf.mxu0
        %v761 = vadd.f32 %v292, %v760
        %v762 = vpop.f32.mrf.mxu0
        %v763 = vpop.f32.mrf.mxu0
        %v764 = vadd.f32 %v292, %v763
        %v765 = vpop.f32.mrf.mxu0
        %766 = vmatprep.mubr.bf16.mxu0 0
        %767 = vmatmul.mubr.bf16.gmra.mxu0 %v447
        %v768 = vpop.f32.mrf.mxu0
        %v769 = vadd.f32 %v292, %v768
        %v770 = vpop.f32.mrf.mxu0
        %v771 = vpop.f32.mrf.mxu0
        %v772 = vadd.f32 %v292, %v771
        %v773 = vpop.f32.mrf.mxu0
        %774 = vmatprep.mubr.bf16.mxu0 0
        %775 = vmatmul.mubr.bf16.gmra.mxu0 %v448
        %v776 = vpop.f32.mrf.mxu0
        %v777 = vadd.f32 %v292, %v776
        %v778 = vpop.f32.mrf.mxu0
        %v779 = vpop.f32.mrf.mxu0
        %v780 = vadd.f32 %v292, %v779
        %v781 = vpop.f32.mrf.mxu0
        %782 = vmatprep.mubr.bf16.mxu0 0
        %783 = vmatmul.mubr.bf16.gmra.mxu0 %v449
        %v784 = vpop.f32.mrf.mxu0
        %v785 = vadd.f32 %v292, %v784
        %v786 = vpop.f32.mrf.mxu0
        %v787 = vpop.f32.mrf.mxu0
        %v788 = vadd.f32 %v292, %v787
        %v789 = vpop.f32.mrf.mxu0
        %790 = vmatprep.mubr.bf16.mxu0 0
        %791 = vmatmul.mubr.bf16.gmra.mxu0 %v450
        %v792 = vpop.f32.mrf.mxu0
        %v793 = vadd.f32 %v292, %v792
        %v794 = vpop.f32.mrf.mxu0
        %v795 = vpop.f32.mrf.mxu0
        %v796 = vadd.f32 %v292, %v795
        %v797 = vpop.f32.mrf.mxu0
        %798 = vmatprep.mubr.bf16.mxu0 0
        %799 = vmatmul.mubr.bf16.gmra.mxu0 %v451
        %v800 = vpop.f32.mrf.mxu0
        %v801 = vadd.f32 %v292, %v800
        %v802 = vpop.f32.mrf.mxu0
        %v803 = vpop.f32.mrf.mxu0
        %v804 = vadd.f32 %v292, %v803
        %v805 = vpop.f32.mrf.mxu0
        %806 = vmatprep.mubr.bf16.mxu0 0
        %807 = vmatmul.mubr.bf16.gmra.mxu0 %v452
        %v808 = vpop.f32.mrf.mxu0
        %v809 = vadd.f32 %v292, %v808
        %v810 = vpop.f32.mrf.mxu0
        %v811 = vpop.f32.mrf.mxu0
        %v812 = vadd.f32 %v292, %v811
        %v813 = vpop.f32.mrf.mxu0
        %814 = vmatprep.mubr.bf16.mxu0 0
        %815 = vmatmul.mubr.bf16.gmra.mxu0 %v453
        %v816 = vpop.f32.mrf.mxu0
        %v817 = vadd.f32 %v292, %v816
        %v818 = vpop.f32.mrf.mxu0
        %v819 = vpop.f32.mrf.mxu0
        %v820 = vadd.f32 %v292, %v819
        %v821 = vpop.f32.mrf.mxu0
        %822 = vdwg.mxu0
        %823 = vst [vmem:[%s203] sm:$0xff] %v569
        %824 = vst [vmem:[%s203 + $0x8] sm:$0xff] %v572
        %825 = vst [vmem:[%s203 + $0x10] sm:$0xff] %v577
        %826 = vst [vmem:[%s203 + $0x18] sm:$0xff] %v580
        %827 = vst [vmem:[%s203 + $0x20] sm:$0xff] %v585
        %828 = vst [vmem:[%s203 + $0x28] sm:$0xff] %v588
        %829 = vst [vmem:[%s203 + $0x30] sm:$0xff] %v593
        %830 = vst [vmem:[%s203 + $0x38] sm:$0xff] %v596
        %831 = vst [vmem:[%s203 + $0x40] sm:$0xff] %v601
        %832 = vst [vmem:[%s203 + $0x48] sm:$0xff] %v604
        %833 = vst [vmem:[%s203 + $0x50] sm:$0xff] %v609
        %834 = vst [vmem:[%s203 + $0x58] sm:$0xff] %v612
        %835 = vst [vmem:[%s203 + $0x60] sm:$0xff] %v617
        %836 = vst [vmem:[%s203 + $0x68] sm:$0xff] %v620
        %837 = vst [vmem:[%s203 + $0x70] sm:$0xff] %v625
        %838 = vst [vmem:[%s203 + $0x78] sm:$0xff] %v628
        %839 = vst [vmem:[%s203 + $0x80] sm:$0xff] %v633
        %840 = vst [vmem:[%s203 + $0x88] sm:$0xff] %v636
        %841 = vst [vmem:[%s203 + $0x90] sm:$0xff] %v641
        %842 = vst [vmem:[%s203 + $0x98] sm:$0xff] %v644
        %843 = vst [vmem:[%s203 + $0xa0] sm:$0xff] %v649
        %844 = vst [vmem:[%s203 + $0xa8] sm:$0xff] %v652
        %845 = vst [vmem:[%s203 + $0xb0] sm:$0xff] %v657
        %846 = vst [vmem:[%s203 + $0xb8] sm:$0xff] %v660
        %847 = vst [vmem:[%s203 + $0xc0] sm:$0xff] %v665
        %848 = vst [vmem:[%s203 + $0xc8] sm:$0xff] %v668
        %849 = vst [vmem:[%s203 + $0xd0] sm:$0xff] %v673
        %850 = vst [vmem:[%s203 + $0xd8] sm:$0xff] %v676
        %851 = vst [vmem:[%s203 + $0xe0] sm:$0xff] %v681
        %852 = vst [vmem:[%s203 + $0xe8] sm:$0xff] %v684
        %853 = vst [vmem:[%s203 + $0xf0] sm:$0xff] %v689
        %854 = vst [vmem:[%s203 + $0xf8] sm:$0xff] %v692
        %855 = vst [vmem:[%s203 + $0x100] sm:$0xff] %v697
        %856 = vst [vmem:[%s203 + $0x108] sm:$0xff] %v700
        %857 = vst [vmem:[%s203 + $0x110] sm:$0xff] %v705
        %858 = vst [vmem:[%s203 + $0x118] sm:$0xff] %v708
        %859 = vst [vmem:[%s203 + $0x120] sm:$0xff] %v713
        %860 = vst [vmem:[%s203 + $0x128] sm:$0xff] %v716
        %861 = vst [vmem:[%s203 + $0x130] sm:$0xff] %v721
        %862 = vst [vmem:[%s203 + $0x138] sm:$0xff] %v724
        %863 = vst [vmem:[%s203 + $0x140] sm:$0xff] %v729
        %864 = vst [vmem:[%s203 + $0x148] sm:$0xff] %v732
        %865 = vst [vmem:[%s203 + $0x150] sm:$0xff] %v737
        %866 = vst [vmem:[%s203 + $0x158] sm:$0xff] %v740
        %867 = vst [vmem:[%s203 + $0x160] sm:$0xff] %v745
        %868 = vst [vmem:[%s203 + $0x168] sm:$0xff] %v748
        %869 = vst [vmem:[%s203 + $0x170] sm:$0xff] %v753
        %870 = vst [vmem:[%s203 + $0x178] sm:$0xff] %v756
        %871 = vst [vmem:[%s203 + $0x180] sm:$0xff] %v761
        %872 = vst [vmem:[%s203 + $0x188] sm:$0xff] %v764
        %873 = vst [vmem:[%s203 + $0x190] sm:$0xff] %v769
        %874 = vst [vmem:[%s203 + $0x198] sm:$0xff] %v772
        %875 = vst [vmem:[%s203 + $0x1a0] sm:$0xff] %v777
        %876 = vst [vmem:[%s203 + $0x1a8] sm:$0xff] %v780
        %877 = vst [vmem:[%s203 + $0x1b0] sm:$0xff] %v785
        %878 = vst [vmem:[%s203 + $0x1b8] sm:$0xff] %v788
        %879 = vst [vmem:[%s203 + $0x1c0] sm:$0xff] %v793
        %880 = vst [vmem:[%s203 + $0x1c8] sm:$0xff] %v796
        %881 = vst [vmem:[%s203 + $0x1d0] sm:$0xff] %v801
        %882 = vst [vmem:[%s203 + $0x1d8] sm:$0xff] %v804
        %883 = vst [vmem:[%s203 + $0x1e0] sm:$0xff] %v809
        %884 = vst [vmem:[%s203 + $0x1e8] sm:$0xff] %v812
        %885 = vst [vmem:[%s203 + $0x1f0] sm:$0xff] %v817
        %886 = vst [vmem:[%s203 + $0x1f8] sm:$0xff] %v820
        %s887 = sand.u32 %s97, 1
        %s888 = scalar_lea.sflag [#allocation4], %s887
        %s889 = sand.u32 %s97, 1
        %s890 = smul.addr %s889, 512
        %s891 = scalar_lea.vmem [#allocation7], %s890
        // Predicated region
        $region41: #{tpu_custom_call.1} parent=31 // pred_check
          %p892 = pneg %p107
        $region42: #{tpu_custom_call.1} parent=31 // pred_check_branch
          %894 = sbr.rel (%p892) target = $region44
        $region43: #{tpu_custom_call.1} parent=31 // pred_region
          %s895 = smul.u32 64, %s21
          %s897 = ssub.s32 8192, 8192
          %898 = vsyncadd %s888, %s897
          %s899 = smul.addr %s895, 128
          %s900 = scalar_lea.hbm %s3, %s899
          %s901 = sshll.u32 %s891, 4
          %s902 = int_to_ptr.vmem [resolvable:$true] %s901
          %907 = dma.vmem_to_hbm [thread:$0]  %s902, 8192, %s900, %s888, 128, 128, 8
        $region44: #{tpu_custom_call.1} parent=31 // pred_fallthru
          _
      $region32: #{tpu_custom_call.1} parent=5 // pred_fallthru
        _
      %p908 = scmp.le.s32.totalorder 2, %s16
      // Predicated region
      $region45: #{tpu_custom_call.1} parent=5 // pred_check
        %p909 = pneg %p908
      $region46: #{tpu_custom_call.1} parent=5 // pred_check_branch
        %911 = sbr.rel (%p909) target = $region48
      $region47: #{tpu_custom_call.1} parent=5 // pred_region
        %s912 = ssub.s32 %s16, 2
        // Predicated region
        $region49: #{tpu_custom_call.1} parent=47 // pred_check
          %p913 = pneg %p113
        $region50: #{tpu_custom_call.1} parent=47 // pred_check_branch
          %915 = sbr.rel (%p913) target = $region52
        $region51: #{tpu_custom_call.1} parent=47 // pred_region
          %s916 = sand.u32 %s98, 1
          %s917 = scalar_lea.sflag [#allocation4], %s916
          %s918 = sand.u32 %s98, 1
          %s919 = smul.addr %s918, 512
          %s920 = scalar_lea.vmem [#allocation7], %s919
          %921 = dma.done %s917, 8192
        $region52: #{tpu_custom_call.1} parent=47 // pred_fallthru
          _
      $region48: #{tpu_custom_call.1} parent=5 // pred_fallthru
        _
    $region6: #{tpu_custom_call.1} parent=1 // loop_footer
      %s20 = sadd.s32 1, %s16
    $region7: #{tpu_custom_call.1} parent=1 // loop_footer_branch
      %15 = sbr.rel target = $region3
    $region8: #{tpu_custom_call.1} parent=1 // loop_exit
      _
    %922 = vsyncpa [#allocation3], 1
    %s923 = scalar_lea.sflag [#allocation3], 1
    %924 = vsyncpa %s923, 1
    %925 = vsyncpa [#allocation6], 1
    %926 = vsyncpa [#allocation4], 1
    %s927 = scalar_lea.sflag [#allocation4], 1
    %928 = vsyncpa %s927, 1

</llo_original>
